<compile_context>
chip_gen: v7x
topology: tpu7x:2x2x1
jax: 0.10.0
libtpu: 0.0.40
codegen_flags: <defaults>
</compile_context>

<pallas_src>
import functools

import jax
import jax.numpy as jnp
from jax.experimental import pallas as pl
from jax.experimental.pallas import tpu as pltpu

LAYERS = [3, 4, 6, 3]        # ResNet-50
LAST_STRIDE = 1              # Resnet50_s1(stride=1)
BN_EPS = 1e-5
_VMEM_LIMIT = 48 * 1024 * 1024   # safe on v5e/v6e (128 MiB) and v7x (64 MiB)


# =========================== Pallas kernels ==================================

def _mm_kernel(relu, has_res, x_ref, w_ref, b_ref, *rest):
    """Tiled matmul with f32 accumulator; epilogue: +bias (+res) (ReLU)."""
    if has_res:
        r_ref, o_ref, acc_ref = rest
    else:
        (o_ref, acc_ref) = rest
        r_ref = None
    k = pl.program_id(2)

    @pl.when(k == 0)
    def _():
        acc_ref[...] = jnp.zeros_like(acc_ref)

    acc_ref[...] += jnp.dot(x_ref[...], w_ref[...],
                            preferred_element_type=jnp.float32)

    @pl.when(k == pl.num_programs(2) - 1)
    def _():
        out = acc_ref[...] + b_ref[...]
        if has_res:
            out = out + r_ref[...].astype(jnp.float32)
        if relu:
            out = jnp.maximum(out, 0.0)
        o_ref[...] = out.astype(o_ref.dtype)


def _conv3x3_kernel(relu, Ho, Wo, x_ref, w_ref, b_ref, o_ref):
    """Direct 3x3 / stride-1 conv: 9 shifted slices of the padded image in
    VMEM, accumulated via MXU dots (no im2col in HBM)."""
    xin = x_ref[0]                       # (Ho+2, Wo+2, Cin) bf16
    cin = xin.shape[2]
    tco = o_ref.shape[3]
    acc = jnp.zeros((Ho * Wo, tco), jnp.float32)
    for dy in range(3):
        for dx in range(3):
            xs = xin[dy:dy + Ho, dx:dx + Wo, :].reshape(Ho * Wo, cin)
            acc = acc + jnp.dot(xs, w_ref[dy, dx],
                                preferred_element_type=jnp.float32)
    out = acc + b_ref[...]
    if relu:
        out = jnp.maximum(out, 0.0)
    o_ref[0] = out.reshape(Ho, Wo, tco).astype(o_ref.dtype)


def _reduce_mid_kernel(op, P, x_ref, o_ref):
    """Reduce the middle axis of a (TM, P, C) block (mean or max)."""
    xv = x_ref[...]
    acc = xv[:, 0, :].astype(jnp.float32)
    for p in range(1, P):
        v = xv[:, p, :].astype(jnp.float32)
        acc = (acc + v) if op == "mean" else jnp.maximum(acc, v)
    if op == "mean":
        acc = acc * (1.0 / P)
    o_ref[...] = acc.astype(o_ref.dtype)


# =========================== Pallas wrappers ==================================

def _round_up(v, m):
    return ((v + m - 1) // m) * m


def _pick_tk(K):
    if K <= 1536:
        return K
    for tk in (1152, 1024, 768, 512, 384, 256, 128):
        if K % tk == 0:
            return tk
    return K


def fused_matmul(x, w, bias, residual=None, relu=False,
                 out_dtype=jnp.bfloat16):
    """out = [relu]((x @ w) + bias [+ residual]);  x:(M,K) bf16, w:(K,N) bf16."""
    M, K = x.shape
    K2, N = w.shape
    assert K == K2
    TM = min(256, _round_up(M, 8))
    TN = min(N, 512)
    TK = _pick_tk(K)
    nk = K // TK
    has_res = residual is not None

    in_specs = [
        pl.BlockSpec((TM, TK), lambda i, j, k: (i, k)),
        pl.BlockSpec((TK, TN), lambda i, j, k: (k, j)),
        pl.BlockSpec((1, TN), lambda i, j, k: (0, j)),
    ]
    args = [x.astype(jnp.bfloat16), w.astype(jnp.bfloat16),
            bias.reshape(1, N).astype(jnp.float32)]
    if has_res:
        in_specs.append(pl.BlockSpec((TM, TN), lambda i, j, k: (i, j)))
        args.append(residual.astype(jnp.bfloat16))

    return pl.pallas_call(
        functools.partial(_mm_kernel, relu, has_res),
        out_shape=jax.ShapeDtypeStruct((M, N), out_dtype),
        grid=(pl.cdiv(M, TM), pl.cdiv(N, TN), nk),
        in_specs=in_specs,
        out_specs=pl.BlockSpec((TM, TN), lambda i, j, k: (i, j)),
        scratch_shapes=[pltpu.VMEM((TM, TN), jnp.float32)],
        compiler_params=pltpu.CompilerParams(
            dimension_semantics=("parallel", "parallel", "arbitrary"),
            vmem_limit_bytes=_VMEM_LIMIT),
    )(*args)


def conv3x3_direct(x, w_oihw, bn, relu):
    """3x3 conv, stride 1, pad 1, + BN folded into weights, optional ReLU."""
    O, I, kh, kw = w_oihw.shape
    assert kh == 3 and kw == 3
    N, H, W, C = x.shape
    assert C == I
    s, b = bn_scale_bias(bn)
    w = (jnp.transpose(w_oihw, (2, 3, 1, 0)) * s[None, None, None, :]
         ).astype(jnp.bfloat16)                                  # (3,3,I,O)
    xp = jnp.pad(x.astype(jnp.bfloat16), ((0, 0), (1, 1), (1, 1), (0, 0)))
    TCO = min(O, 256)
    return pl.pallas_call(
        functools.partial(_conv3x3_kernel, relu, H, W),
        out_shape=jax.ShapeDtypeStruct((N, H, W, O), jnp.bfloat16),
        grid=(N, pl.cdiv(O, TCO)),
        in_specs=[
            pl.BlockSpec((1, H + 2, W + 2, C), lambda n, j: (n, 0, 0, 0)),
            pl.BlockSpec((3, 3, C, TCO), lambda n, j: (0, 0, 0, j)),
            pl.BlockSpec((1, TCO), lambda n, j: (0, j)),
        ],
        out_specs=pl.BlockSpec((1, H, W, TCO), lambda n, j: (n, 0, 0, j)),
        compiler_params=pltpu.CompilerParams(
            dimension_semantics=("parallel", "parallel"),
            vmem_limit_bytes=_VMEM_LIMIT),
    )(xp, w, b.reshape(1, O).astype(jnp.float32))


def reduce_middle(x, op, out_dtype=jnp.float32):
    """x: (M, P, C) -> (M, C), reducing over the middle axis ('mean'/'max')."""
    M, P, C = x.shape
    TMR = min(M, 256)
    return pl.pallas_call(
        functools.partial(_reduce_mid_kernel, op, P),
        out_shape=jax.ShapeDtypeStruct((M, C), out_dtype),
        grid=(pl.cdiv(M, TMR),),
        in_specs=[pl.BlockSpec((TMR, P, C), lambda i: (i, 0, 0))],
        out_specs=pl.BlockSpec((TMR, C), lambda i: (i, 0)),
        compiler_params=pltpu.CompilerParams(
            dimension_semantics=("parallel",),
            vmem_limit_bytes=_VMEM_LIMIT),
    )(x)


# =========================== JAX glue =========================================

def bn_scale_bias(bn):
    s = bn["gamma"] / jnp.sqrt(bn["var"] + BN_EPS)
    b = bn["beta"] - bn["mean"] * s
    return s, b


def im2col(x, kh, kw, stride, pad, pad_value=0.0):
    """x: (N, H, W, C) -> patches (N, Ho, Wo, kh*kw, C)."""
    N, H, W, C = x.shape
    xp = jnp.pad(x, ((0, 0), (pad, pad), (pad, pad), (0, 0)),
                 constant_values=pad_value)
    Ho = (H + 2 * pad - kh) // stride + 1
    Wo = (W + 2 * pad - kw) // stride + 1
    cols = []
    for i in range(kh):
        for j in range(kw):
            sl = jax.lax.slice(
                xp, (0, i, j, 0),
                (N, i + stride * (Ho - 1) + 1, j + stride * (Wo - 1) + 1, C),
                (1, stride, stride, 1))
            cols.append(sl)
    return jnp.stack(cols, axis=3)


def conv_bn_im2col(x, w_oihw, bn, stride, pad, relu, residual=None):
    """General Conv2d(bias=False)+BN via im2col + fused matmul (7x7 stem and
    the two stride-2 3x3 convs only)."""
    O, I, kh, kw = w_oihw.shape
    s, b = bn_scale_bias(bn)
    patches = im2col(x, kh, kw, stride, pad, 0.0)
    N, Ho, Wo, P, _ = patches.shape
    xm = patches.reshape(N * Ho * Wo, P * I)
    wm = (jnp.transpose(w_oihw, (2, 3, 1, 0)).reshape(kh * kw * I, O)
          * s[None, :])
    res = residual.reshape(N * Ho * Wo, O) if residual is not None else None
    y = fused_matmul(xm, wm, b, residual=res, relu=relu)
    return y.reshape(N, Ho, Wo, O)


def conv1x1_bn(x, w_oihw, bn, stride=1, relu=False, residual=None):
    """1x1 Conv2d + BN [+ residual] [+ ReLU] as a fused matmul."""
    O, I, _, _ = w_oihw.shape
    if stride != 1:
        x = x[:, ::stride, ::stride, :]
    N, H, W, C = x.shape
    s, b = bn_scale_bias(bn)
    wm = (w_oihw.reshape(O, I).T * s[None, :])
    xm = x.reshape(N * H * W, C)
    res = residual.reshape(N * H * W, O) if residual is not None else None
    y = fused_matmul(xm, wm, b, residual=res, relu=relu)
    return y.reshape(N, H, W, O)


def maxpool_3x3_s2(x):
    patches = im2col(x, 3, 3, 2, 1, pad_value=-jnp.inf)
    N, Ho, Wo, P, C = patches.shape
    y = reduce_middle(patches.reshape(N * Ho * Wo, P, C), "max",
                      out_dtype=x.dtype)
    return y.reshape(N, Ho, Wo, C)


@functools.partial(jax.jit, static_argnums=(2,))
def bottleneck(x, p, stride):
    out = conv1x1_bn(x, p["w1"], p["bn1"], relu=True)
    if stride == 1:
        out = conv3x3_direct(out, p["w2"], p["bn2"], relu=True)
    else:
        out = conv_bn_im2col(out, p["w2"], p["bn2"], stride=stride, pad=1,
                             relu=True)
    if "dw" in p:
        residual = conv1x1_bn(x, p["dw"], p["dbn"], stride=stride, relu=False)
    else:
        residual = x
    # conv3 + bn3, add residual, then ReLU (matches Bottleneck.forward)
    return conv1x1_bn(out, p["w3"], p["bn3"], relu=True, residual=residual)


def run_layer(x, blocks, first_stride):
    for bi, blk in enumerate(blocks):
        stride = first_stride if bi == 0 else 1
        x = bottleneck(x, blk, stride)
    return x


def forward(x_bchw, params):
    """Resnet50_s1.forward: backbone -> AdaptiveAvgPool2d(1) -> flatten."""
    x = jnp.transpose(x_bchw, (0, 2, 3, 1)).astype(jnp.bfloat16)   # NHWC
    # Stem: conv1(7x7,s2,p3) + bn1 (NOTE: reference ResNet.forward has no ReLU
    # here), then 3x3/s2 maxpool.
    x = conv_bn_im2col(x, params["conv1_w"], params["bn1"], stride=2, pad=3,
                       relu=False)
    x = maxpool_3x3_s2(x)
    strides = [1, 2, 2, LAST_STRIDE]
    for li in range(4):
        x = run_layer(x, params[f"layer{li + 1}"], strides[li])
    # AdaptiveAvgPool2d(1) + flatten -> (B, 2048)
    N, H, W, C = x.shape
    feat = reduce_middle(x.reshape(N, H * W, C), "mean",
                         out_dtype=jnp.float32)
    return feat


# =========================== parameter init ==================================

def init_params(key):
    keys = iter(jax.random.split(key, 256))

    def rand(shape):
        fan_in = 1
        for d in shape[1:]:
            fan_in *= d
        scale = float(fan_in) ** -0.5
        return jax.random.normal(next(keys), shape, dtype=jnp.float32) * scale

    def bn(c):
        return dict(gamma=jnp.ones((c,), jnp.float32),
                    beta=jnp.zeros((c,), jnp.float32),
                    mean=jnp.zeros((c,), jnp.float32),
                    var=jnp.ones((c,), jnp.float32))

    params = {"conv1_w": rand((64, 3, 7, 7)), "bn1": bn(64)}
    inplanes = 64
    plane_list = [64, 128, 256, 512]
    stride_list = [1, 2, 2, LAST_STRIDE]
    for li in range(4):
        planes = plane_list[li]
        blocks = []
        for bi in range(LAYERS[li]):
            cin = inplanes if bi == 0 else planes * 4
            blk = {"w1": rand((planes, cin, 1, 1)), "bn1": bn(planes),
                   "w2": rand((planes, planes, 3, 3)), "bn2": bn(planes),
                   "w3": rand((planes * 4, planes, 1, 1)), "bn3": bn(planes * 4)}
            if bi == 0 and (stride_list[li] != 1 or inplanes != planes * 4):
                blk["dw"] = rand((planes * 4, inplanes, 1, 1))
                blk["dbn"] = bn(planes * 4)
            blocks.append(blk)
        inplanes = planes * 4
        params[f"layer{li + 1}"] = blocks
    return params


# =========================== main =============================================

if __name__ == "__main__":
    key = jax.random.PRNGKey(0)
    pkey, xkey = jax.random.split(key)
    params = init_params(pkey)

    # Small input consistent with the module: (B, 3, H, W).
    B, H, W = 2, 64, 64
    x = jax.random.normal(xkey, (B, 3, H, W), dtype=jnp.float32)

    out = forward(x, params)
    out = jax.block_until_ready(out)

    assert out.shape == (B, 2048), out.shape
    assert bool(jnp.all(jnp.isfinite(out)))
    print("KERNEL_OK")
</pallas_src>

<mosaic_0001>
module attributes {stable_mosaic.version = 11 : i64} {
  func.func @_mm_kernel(%arg0: i32, %arg1: i32, %arg2: i32, %arg3: memref<256x147xbf16, #tpu.memory_space<vmem>>, %arg4: memref<147x64xbf16, #tpu.memory_space<vmem>>, %arg5: memref<1x64xf32, #tpu.memory_space<vmem>>, %arg6: memref<256x64xbf16, #tpu.memory_space<vmem>>, %arg7: memref<256x64xf32, #tpu.memory_space<vmem>>) attributes {dimension_semantics = [#tpu.dimension_semantics<parallel>, #tpu.dimension_semantics<parallel>, #tpu.dimension_semantics<arbitrary>], iteration_bounds = array<i64: 8, 1, 1>, scalar_prefetch = 0 : i64, scratch_operands = 1 : i64, tpu.core_type = #tpu.core_type<tc>, window_params = [{transform_indices = @transform_0, window_bounds = array<i64: 256, 147>}, {transform_indices = @transform_1, window_bounds = array<i64: 147, 64>}, {transform_indices = @transform_2, window_bounds = array<i64: 1, 64>}, {transform_indices = @transform_3, window_bounds = array<i64: 256, 64>}]} {
    %c0_i32 = arith.constant 0 : i32
    %0 = arith.cmpi eq, %arg2, %c0_i32 : i32
    %1 = arith.extui %0 : i1 to i32
    %c0_i32_0 = arith.constant 0 : i32
    %2 = arith.cmpi ne, %1, %c0_i32_0 : i32
    scf.if %2 {
      %cst_10 = arith.constant 0.000000e+00 : f32
      %12 = vector.broadcast %cst_10 : f32 to vector<256x64xf32>
      %c0_11 = arith.constant 0 : index
      %c0_12 = arith.constant 0 : index
      %13 = vector.load %arg7[%c0_11, %c0_12] : memref<256x64xf32, #tpu.memory_space<vmem>>, vector<256x64xf32>
      tpu.vector_store %arg7[%c0_11, %c0_12], %12 {strides = array<i32>} : memref<256x64xf32, #tpu.memory_space<vmem>>, vector<256x64xf32>,
    } else {
    }
    %c0 = arith.constant 0 : index
    %c0_1 = arith.constant 0 : index
    %3 = vector.load %arg7[%c0, %c0_1] : memref<256x64xf32, #tpu.memory_space<vmem>>, vector<256x64xf32>
    %c0_2 = arith.constant 0 : index
    %c0_3 = arith.constant 0 : index
    %4 = vector.load %arg3[%c0_2, %c0_3] : memref<256x147xbf16, #tpu.memory_space<vmem>>, vector<256x147xbf16>
    %c0_4 = arith.constant 0 : index
    %c0_5 = arith.constant 0 : index
    %5 = vector.load %arg4[%c0_4, %c0_5] : memref<147x64xbf16, #tpu.memory_space<vmem>>, vector<147x64xbf16>
    %cst = arith.constant dense<0.000000e+00> : vector<256x64xf32>
    %6 = tpu.matmul %4, %5, %cst {dimension_numbers = #tpu.dot_dimension_numbers<[1], [0], [0], [1], [0, 0, 1, 1], [], []>} : vector<256x147xbf16>, vector<147x64xbf16>, vector<256x64xf32> -> vector<256x64xf32>
    %7 = arith.addf %3, %6 : vector<256x64xf32>
    %c0_6 = arith.constant 0 : index
    %c0_7 = arith.constant 0 : index
    %8 = vector.load %arg7[%c0_6, %c0_7] : memref<256x64xf32, #tpu.memory_space<vmem>>, vector<256x64xf32>
    tpu.vector_store %arg7[%c0_6, %c0_7], %7 {strides = array<i32>} : memref<256x64xf32, #tpu.memory_space<vmem>>, vector<256x64xf32>,
    %c0_i32_8 = arith.constant 0 : i32
    %9 = arith.cmpi eq, %arg2, %c0_i32_8 : i32
    %10 = arith.extui %9 : i1 to i32
    %c0_i32_9 = arith.constant 0 : i32
    %11 = arith.cmpi ne, %10, %c0_i32_9 : i32
    scf.if %11 {
      %c0_10 = arith.constant 0 : index
      %c0_11 = arith.constant 0 : index
      %12 = vector.load %arg7[%c0_10, %c0_11] : memref<256x64xf32, #tpu.memory_space<vmem>>, vector<256x64xf32>
      %c0_12 = arith.constant 0 : index
      %c0_13 = arith.constant 0 : index
      %13 = vector.load %arg5[%c0_12, %c0_13] : memref<1x64xf32, #tpu.memory_space<vmem>>, vector<1x64xf32>
      %14 = vector.broadcast %13 : vector<1x64xf32> to vector<256x64xf32>
      %15 = arith.addf %12, %14 : vector<256x64xf32>
      %16 = arith.truncf %15 : vector<256x64xf32> to vector<256x64xbf16>
      %c0_14 = arith.constant 0 : index
      %c0_15 = arith.constant 0 : index
      %17 = vector.load %arg6[%c0_14, %c0_15] : memref<256x64xbf16, #tpu.memory_space<vmem>>, vector<256x64xbf16>
      tpu.vector_store %arg6[%c0_14, %c0_15], %16 {strides = array<i32>} : memref<256x64xbf16, #tpu.memory_space<vmem>>, vector<256x64xbf16>,
    } else {
    }
    return
  }
  func.func @transform_0(%arg0: i32, %arg1: i32, %arg2: i32) -> (i32, i32) {
    %c0_i32 = arith.constant 0 : i32
    return %arg0, %arg2 : i32, i32
  }
  func.func @transform_1(%arg0: i32, %arg1: i32, %arg2: i32) -> (i32, i32) {
    %c0_i32 = arith.constant 0 : i32
    return %arg2, %arg1 : i32, i32
  }
  func.func @transform_2(%arg0: i32, %arg1: i32, %arg2: i32) -> (i32, i32) {
    %c0_i32 = arith.constant 0 : i32
    %c0_i32_0 = arith.constant 0 : i32
    return %c0_i32, %arg1 : i32, i32
  }
  func.func @transform_3(%arg0: i32, %arg1: i32, %arg2: i32) -> (i32, i32) {
    %c0_i32 = arith.constant 0 : i32
    return %arg0, %arg1 : i32, i32
  }
}

</mosaic_0001>

<llo_original>
// kernel: tpu_custom_call.1
$region0: #{tpu_custom_call.1}
  #allocation0 [shape = 'u32[]', space=smem, size = 0x4, offset = 0x4, fixed_abs, tag = 'smem constant byte address 0x4 - core index']
  #allocation1 [shape = 'u32[144,128]{1,0:T(1,128)}', space=vmem, size = 0x12000, scoped, tag = 'internal scratch']
  #allocation2 [shape = 'f32[256,64]{1,0:T(8,128)}', space=vmem, size = 0x20000, scoped, tag = 'scratch operand']
  %s0 = inlined_call_operand.vmem [shape: bf16[2048,147], index: 0, kind: input, shape index: {}]
  %s1 = inlined_call_operand.vmem [shape: bf16[147,64], index: 1, kind: input, shape index: {}]
  %s2 = inlined_call_operand.vmem [shape: f32[1,64], index: 2, kind: input, shape index: {}]
  %s3 = inlined_call_operand.vmem [shape: bf16[2048,64], index: 3, kind: output, shape index: {}]
  %s4 = sld [smem:[#allocation0]]
  $region53: #{tpu_custom_call.1} parent=0
    _
  %s6 = ssub.s32 1, %s4
  %s7 = scalar_select 0, %s6, %s4
  loop: start=0, step=1, limit=10
  $region2: #{tpu_custom_call.1} parent=0 // loop_pre_header
    _
  $region3: #{tpu_custom_call.1} parent=0 // loop_header
    %s9 = sphi 0, %s13
    %p10 = scmp.ge.s32.totalorder %s9, 10
    %s16 = sphi 0, %s35
    %s17 = sphi 0, %s31
    %s18 = sphi 0, %s27
    %s19 = sphi 0, %s16
    %s20 = sphi 0, %s17
    %s21 = sphi 0, %s18
    %s22 = sphi 0, %s19
    %s23 = sphi 0, %s20
    %s24 = sphi 0, %s21
    %s40 = sphi 0, %s42
    %s43 = sphi 0, %s40
    %s44 = sphi 0, %s43
    %s60 = sphi 0, %s44
    %s68 = sphi 0, %s70
    %s71 = sphi 0, %s68
    %s72 = sphi 0, %s71
    %s88 = sphi 0, %s72
    %s94 = sphi 0, %s96
    %s97 = sphi 0, %s94
    %s98 = sphi 0, %s97
    %s114 = sphi 0, %s98
    %s122 = sphi 0, %s124
    %s125 = sphi 0, %s122
    %s126 = sphi 0, %s125
    %s142 = sphi 0, %s126
  $region4: #{tpu_custom_call.1} parent=0 // loop_header_branch
    %12 = sbr.rel (%p10) target = $region8
  $region5: #{tpu_custom_call.1} parent=0 // loop_body
    %s14 = ssub.s32 %s9, 1
    %s15 = ssub.s32 %s9, 2
    %s25 = sadd.s32 1, %s18
    %p26 = scmp.ge.s32.totalorder %s25, 1
    %s27 = scalar_select %p26, 0, %s25
    %s28 = sadd.s32 1, %s17
    %s29 = scalar_select %p26, %s28, %s17
    %p30 = scmp.ge.s32.totalorder %s29, 1
    %s31 = scalar_select %p30, 0, %s29
    %s32 = sadd.s32 1, %s16
    %s33 = scalar_select %p30, %s32, %s16
    %p34 = scmp.ge.s32.totalorder %s33, 8
    %s35 = scalar_select %p34, 0, %s33
    %s36 = ssub.s32 %s16, %s35
    %s37 = ssub.s32 %s18, %s27
    %s38 = sor.u32 %s36, %s37
    %p39 = scmp.eq.s32.totalorder %s38, 0
    %s41 = sadd.s32 %s40, 1
    %s42 = scalar_select %p39, %s40, %s41
    %p45 = pneg %p39
    %p46 = scmp.eq.s32.totalorder %s9, 7
    %p47 = por %p45, %p46
    %p48 = scmp.ne.s32.totalorder %s40, %s43
    %p49 = scmp.eq.s32.totalorder %s9, 0
    %p50 = por %p48, %p49
    %p51 = scmp.ne.s32.totalorder %s40, %s43
    %p52 = scmp.eq.s32.totalorder %s14, 7
    %p53 = por %p51, %p52
    %p54 = scmp.ne.s32.totalorder %s43, %s44
    %p55 = scmp.eq.s32.totalorder %s14, 0
    %p56 = por %p54, %p55
    %p57 = scmp.ne.s32.totalorder %s43, %s44
    %p58 = scmp.eq.s32.totalorder %s15, 7
    %p59 = por %p57, %p58
    %p61 = scmp.ne.s32.totalorder %s44, %s60
    %p62 = scmp.eq.s32.totalorder %s15, 0
    %p63 = por %p61, %p62
    %s64 = ssub.s32 %s18, %s27
    %s65 = ssub.s32 %s17, %s31
    %s66 = sor.u32 %s64, %s65
    %p67 = scmp.eq.s32.totalorder %s66, 0
    %s69 = sadd.s32 %s68, 1
    %s70 = scalar_select %p67, %s68, %s69
    %p73 = pneg %p67
    %p74 = scmp.eq.s32.totalorder %s9, 7
    %p75 = por %p73, %p74
    %p76 = scmp.ne.s32.totalorder %s68, %s71
    %p77 = scmp.eq.s32.totalorder %s9, 0
    %p78 = por %p76, %p77
    %p79 = scmp.ne.s32.totalorder %s68, %s71
    %p80 = scmp.eq.s32.totalorder %s14, 7
    %p81 = por %p79, %p80
    %p82 = scmp.ne.s32.totalorder %s71, %s72
    %p83 = scmp.eq.s32.totalorder %s14, 0
    %p84 = por %p82, %p83
    %p85 = scmp.ne.s32.totalorder %s71, %s72
    %p86 = scmp.eq.s32.totalorder %s15, 7
    %p87 = por %p85, %p86
    %p89 = scmp.ne.s32.totalorder %s72, %s88
    %p90 = scmp.eq.s32.totalorder %s15, 0
    %p91 = por %p89, %p90
    %s92 = ssub.s32 %s17, %s31
    %p93 = scmp.eq.s32.totalorder %s92, 0
    %s95 = sadd.s32 %s94, 1
    %s96 = scalar_select %p93, %s94, %s95
    %p99 = pneg %p93
    %p100 = scmp.eq.s32.totalorder %s9, 7
    %p101 = por %p99, %p100
    %p102 = scmp.ne.s32.totalorder %s94, %s97
    %p103 = scmp.eq.s32.totalorder %s9, 0
    %p104 = por %p102, %p103
    %p105 = scmp.ne.s32.totalorder %s94, %s97
    %p106 = scmp.eq.s32.totalorder %s14, 7
    %p107 = por %p105, %p106
    %p108 = scmp.ne.s32.totalorder %s97, %s98
    %p109 = scmp.eq.s32.totalorder %s14, 0
    %p110 = por %p108, %p109
    %p111 = scmp.ne.s32.totalorder %s97, %s98
    %p112 = scmp.eq.s32.totalorder %s15, 7
    %p113 = por %p111, %p112
    %p115 = scmp.ne.s32.totalorder %s98, %s114
    %p116 = scmp.eq.s32.totalorder %s15, 0
    %p117 = por %p115, %p116
    %s118 = ssub.s32 %s16, %s35
    %s119 = ssub.s32 %s17, %s31
    %s120 = sor.u32 %s118, %s119
    %p121 = scmp.eq.s32.totalorder %s120, 0
    %s123 = sadd.s32 %s122, 1
    %s124 = scalar_select %p121, %s122, %s123
    %p127 = pneg %p121
    %p128 = scmp.eq.s32.totalorder %s9, 7
    %p129 = por %p127, %p128
    %p130 = scmp.ne.s32.totalorder %s122, %s125
    %p131 = scmp.eq.s32.totalorder %s9, 0
    %p132 = por %p130, %p131
    %p133 = scmp.ne.s32.totalorder %s122, %s125
    %p134 = scmp.eq.s32.totalorder %s14, 7
    %p135 = por %p133, %p134
    %p136 = scmp.ne.s32.totalorder %s125, %s126
    %p137 = scmp.eq.s32.totalorder %s14, 0
    %p138 = por %p136, %p137
    %p139 = scmp.ne.s32.totalorder %s125, %s126
    %p140 = scmp.eq.s32.totalorder %s15, 7
    %p141 = por %p139, %p140
    %p143 = scmp.ne.s32.totalorder %s126, %s142
    %p144 = scmp.eq.s32.totalorder %s15, 0
    %p145 = por %p143, %p144
    %p146 = scmp.le.s32.totalorder 1, %s9
    %p147 = scmp.lt.s32.totalorder %s9, 9
    %p148 = pnand %p146, %p147
    %p149 = pneg %p148
    // Predicated region
    $region9: #{tpu_custom_call.1} parent=5 // pred_check
      _
    $region10: #{tpu_custom_call.1} parent=5 // pred_check_branch
      %151 = sbr.rel (%p148) target = $region12
    $region11: #{tpu_custom_call.1} parent=5 // pred_region
      %s152 = ssub.s32 %s9, 1
      // Predicated region
      $region13: #{tpu_custom_call.1} parent=11 // pred_check
        %p153 = pneg %p84
      $region14: #{tpu_custom_call.1} parent=11 // pred_check_branch
        %155 = sbr.rel (%p153) target = $region16
      $region15: #{tpu_custom_call.1} parent=11 // pred_region
        %s156 = smul.u32 19, %s21
        %p157 = scmp.lt.s32.totalorder %s156, 18
        %s158 = scalar_select %p157, %s156, 18
        %p159 = scmp.lt.s32.totalorder %s20, 0
        %s160 = scalar_select %p159, %s20, 0
        %s161 = sadd.s32 %s160, %s158
        %s162 = smul.addr %s161, 4
        %s163 = scalar_lea.vmem %s1, %s162
        %s164 = smul.u32 19, %s21
      $region16: #{tpu_custom_call.1} parent=11 // pred_fallthru
        _
      // Predicated region
      $region17: #{tpu_custom_call.1} parent=11 // pred_check
        %p165 = pneg %p110
      $region18: #{tpu_custom_call.1} parent=11 // pred_check_branch
        %167 = sbr.rel (%p165) target = $region20
      $region19: #{tpu_custom_call.1} parent=11 // pred_region
        %p168 = scmp.lt.s32.totalorder %s20, 0
        %s169 = scalar_select %p168, %s20, 0
        %s170 = scalar_lea.vmem %s2, %s169
      $region20: #{tpu_custom_call.1} parent=11 // pred_fallthru
        _
    $region12: #{tpu_custom_call.1} parent=5 // pred_fallthru
      _
    %p171 = scmp.lt.s32.totalorder %s9, 8
    // Predicated region
    $region21: #{tpu_custom_call.1} parent=5 // pred_check
      %p172 = pneg %p171
    $region22: #{tpu_custom_call.1} parent=5 // pred_check_branch
      %174 = sbr.rel (%p172) target = $region24
    $region23: #{tpu_custom_call.1} parent=5 // pred_region
      // Predicated region
      $region25: #{tpu_custom_call.1} parent=23 // pred_check
        %p175 = pneg %p50
      $region26: #{tpu_custom_call.1} parent=23 // pred_check_branch
        %177 = sbr.rel (%p175) target = $region28
      $region27: #{tpu_custom_call.1} parent=23 // pred_region
        %s178 = smul.u32 32, %s16
        %s179 = smul.u32 2, %s18
        %p180 = scmp.lt.s32.totalorder %s178, 255
        %s181 = scalar_select %p180, %s178, 255
        %p182 = scmp.lt.s32.totalorder %s179, 1
        %s183 = scalar_select %p182, %s179, 1
        %s184 = smul.addr %s181, 2
        %s185 = sadd.s32 %s183, %s184
        %s186 = smul.addr %s185, 4
        %s187 = scalar_lea.vmem %s0, %s186
        %s188 = smul.u32 32, %s16
        %s189 = smul.u32 2, %s18
      $region28: #{tpu_custom_call.1} parent=23 // pred_fallthru
        _
    $region24: #{tpu_custom_call.1} parent=5 // pred_fallthru
      _
    %p190 = scmp.le.s32.totalorder 1, %s9
    %p191 = scmp.lt.s32.totalorder %s9, 9
    %p192 = pnand %p190, %p191
    %p193 = pneg %p192
    // Predicated region
    $region29: #{tpu_custom_call.1} parent=5 // pred_check
      _
    $region30: #{tpu_custom_call.1} parent=5 // pred_check_branch
      %195 = sbr.rel (%p192) target = $region32
    $region31: #{tpu_custom_call.1} parent=5 // pred_region
      %s196 = ssub.s32 %s9, 1
      %s197 = smul.u32 32, %s19
      %s198 = smul.u32 2, %s21
      %p199 = scmp.lt.s32.totalorder %s197, 255
      %s200 = scalar_select %p199, %s197, 255
      %p201 = scmp.lt.s32.totalorder %s198, 1
      %s202 = scalar_select %p201, %s198, 1
      %s203 = smul.addr %s200, 2
      %s204 = sadd.s32 %s202, %s203
      %s205 = smul.addr %s204, 4
      %s206 = scalar_lea.vmem %s0, %s205
      %p207 = pneg %p56
      %p208 = pneg %p53
      %s209 = smul.u32 19, %s21
      %p210 = scmp.lt.s32.totalorder %s209, 18
      %s211 = scalar_select %p210, %s209, 18
      %p212 = scmp.lt.s32.totalorder %s20, 0
      %s213 = scalar_select %p212, %s20, 0
      %s214 = sadd.s32 %s213, %s211
      %s215 = smul.addr %s214, 4
      %s216 = scalar_lea.vmem %s1, %s215
      %p217 = pneg %p84
      %p218 = pneg %p81
      %p219 = scmp.lt.s32.totalorder %s20, 0
      %s220 = scalar_select %p219, %s20, 0
      %s221 = scalar_lea.vmem %s2, %s220
      %p222 = pneg %p110
      %p223 = pneg %p107
      %p224 = pneg %p138
      %p225 = pneg %p135
      %s226 = smul.u32 32, %s19
      %p227 = scmp.lt.s32.totalorder %s226, 255
      %s228 = scalar_select %p227, %s226, 255
      %p229 = scmp.lt.s32.totalorder %s20, 0
      %s230 = scalar_select %p229, %s20, 0
      %s231 = sadd.s32 %s230, %s228
      %s232 = smul.addr %s231, 4
      %s233 = scalar_lea.vmem %s3, %s232
      %s234 = smul.u32 32, %s19
      %s235 = smul.u32 2, %s21
      %p236 = scmp.lt.s32.totalorder %s234, 255
      %s237 = scalar_select %p236, %s234, 255
      %p238 = scmp.lt.s32.totalorder %s235, 1
      %s239 = scalar_select %p238, %s235, 1
      %s240 = smul.addr %s237, 2
      %s241 = sadd.s32 %s239, %s240
      %s242 = smul.addr %s241, 4
      %s243 = scalar_lea.vmem %s0, %s242
      %s244 = smul.u32 32, %s19
      %s245 = smul.u32 2, %s21
      %s246 = smul.u32 19, %s21
      %p247 = scmp.lt.s32.totalorder %s246, 18
      %s248 = scalar_select %p247, %s246, 18
      %p249 = scmp.lt.s32.totalorder %s20, 0
      %s250 = scalar_select %p249, %s20, 0
      %s251 = sadd.s32 %s250, %s248
      %s252 = smul.addr %s251, 4
      %s253 = scalar_lea.vmem %s1, %s252
      %s254 = smul.u32 19, %s21
      %p255 = scmp.lt.s32.totalorder %s20, 0
      %s256 = scalar_select %p255, %s20, 0
      %s257 = scalar_lea.vmem %s2, %s256
      %s258 = smul.u32 32, %s19
      %p259 = scmp.lt.s32.totalorder %s258, 255
      %s260 = scalar_select %p259, %s258, 255
      %p261 = scmp.lt.s32.totalorder %s20, 0
      %s262 = scalar_select %p261, %s20, 0
      %s263 = sadd.s32 %s262, %s260
      %s264 = smul.addr %s263, 4
      %s265 = scalar_lea.vmem %s3, %s264
      %s266 = smul.u32 32, %s19
      %p268 = scmp.eq.s32.totalorder %s21, 0
      // Predicated region
      $region33: #{tpu_custom_call.1} parent=31 // pred_check
        %p269 = pneg %p268
      $region34: #{tpu_custom_call.1} parent=31 // pred_check_branch
        %271 = sbr.rel (%p269) target = $region36
      $region35: #{tpu_custom_call.1} parent=31 // pred_region
        %vm272 = vcmask 523264
        %273 = vst.msk [vmem:[#allocation2] sm:$0xff] %vm272, 0.0
        %274 = vst.msk [vmem:[#allocation2 + $0x8] sm:$0xff] %vm272, 0.0
        %275 = vst.msk [vmem:[#allocation2 + $0x10] sm:$0xff] %vm272, 0.0
        %276 = vst.msk [vmem:[#allocation2 + $0x18] sm:$0xff] %vm272, 0.0
        %277 = vst.msk [vmem:[#allocation2 + $0x20] sm:$0xff] %vm272, 0.0
        %278 = vst.msk [vmem:[#allocation2 + $0x28] sm:$0xff] %vm272, 0.0
        %279 = vst.msk [vmem:[#allocation2 + $0x30] sm:$0xff] %vm272, 0.0
        %280 = vst.msk [vmem:[#allocation2 + $0x38] sm:$0xff] %vm272, 0.0
        %281 = vst.msk [vmem:[#allocation2 + $0x40] sm:$0xff] %vm272, 0.0
        %282 = vst.msk [vmem:[#allocation2 + $0x48] sm:$0xff] %vm272, 0.0
        %283 = vst.msk [vmem:[#allocation2 + $0x50] sm:$0xff] %vm272, 0.0
        %284 = vst.msk [vmem:[#allocation2 + $0x58] sm:$0xff] %vm272, 0.0
        %285 = vst.msk [vmem:[#allocation2 + $0x60] sm:$0xff] %vm272, 0.0
        %286 = vst.msk [vmem:[#allocation2 + $0x68] sm:$0xff] %vm272, 0.0
        %287 = vst.msk [vmem:[#allocation2 + $0x70] sm:$0xff] %vm272, 0.0
        %288 = vst.msk [vmem:[#allocation2 + $0x78] sm:$0xff] %vm272, 0.0
        %289 = vst.msk [vmem:[#allocation2 + $0x80] sm:$0xff] %vm272, 0.0
        %290 = vst.msk [vmem:[#allocation2 + $0x88] sm:$0xff] %vm272, 0.0
        %291 = vst.msk [vmem:[#allocation2 + $0x90] sm:$0xff] %vm272, 0.0
        %292 = vst.msk [vmem:[#allocation2 + $0x98] sm:$0xff] %vm272, 0.0
        %293 = vst.msk [vmem:[#allocation2 + $0xa0] sm:$0xff] %vm272, 0.0
        %294 = vst.msk [vmem:[#allocation2 + $0xa8] sm:$0xff] %vm272, 0.0
        %295 = vst.msk [vmem:[#allocation2 + $0xb0] sm:$0xff] %vm272, 0.0
        %296 = vst.msk [vmem:[#allocation2 + $0xb8] sm:$0xff] %vm272, 0.0
        %297 = vst.msk [vmem:[#allocation2 + $0xc0] sm:$0xff] %vm272, 0.0
        %298 = vst.msk [vmem:[#allocation2 + $0xc8] sm:$0xff] %vm272, 0.0
        %299 = vst.msk [vmem:[#allocation2 + $0xd0] sm:$0xff] %vm272, 0.0
        %300 = vst.msk [vmem:[#allocation2 + $0xd8] sm:$0xff] %vm272, 0.0
        %301 = vst.msk [vmem:[#allocation2 + $0xe0] sm:$0xff] %vm272, 0.0
        %302 = vst.msk [vmem:[#allocation2 + $0xe8] sm:$0xff] %vm272, 0.0
        %303 = vst.msk [vmem:[#allocation2 + $0xf0] sm:$0xff] %vm272, 0.0
        %304 = vst.msk [vmem:[#allocation2 + $0xf8] sm:$0xff] %vm272, 0.0
      $region36: #{tpu_custom_call.1} parent=31 // pred_fallthru
        _
      %v305 = vld [vmem:[#allocation2] sm:$0xff]
      %v306 = vld [vmem:[#allocation2 + $0x8] sm:$0xff]
      %v307 = vld [vmem:[#allocation2 + $0x10] sm:$0xff]
      %v308 = vld [vmem:[#allocation2 + $0x18] sm:$0xff]
      %v309 = vld [vmem:[#allocation2 + $0x20] sm:$0xff]
      %v310 = vld [vmem:[#allocation2 + $0x28] sm:$0xff]
      %v311 = vld [vmem:[#allocation2 + $0x30] sm:$0xff]
      %v312 = vld [vmem:[#allocation2 + $0x38] sm:$0xff]
      %v313 = vld [vmem:[#allocation2 + $0x40] sm:$0xff]
      %v314 = vld [vmem:[#allocation2 + $0x48] sm:$0xff]
      %v315 = vld [vmem:[#allocation2 + $0x50] sm:$0xff]
      %v316 = vld [vmem:[#allocation2 + $0x58] sm:$0xff]
      %v317 = vld [vmem:[#allocation2 + $0x60] sm:$0xff]
      %v318 = vld [vmem:[#allocation2 + $0x68] sm:$0xff]
      %v319 = vld [vmem:[#allocation2 + $0x70] sm:$0xff]
      %v320 = vld [vmem:[#allocation2 + $0x78] sm:$0xff]
      %v321 = vld [vmem:[#allocation2 + $0x80] sm:$0xff]
      %v322 = vld [vmem:[#allocation2 + $0x88] sm:$0xff]
      %v323 = vld [vmem:[#allocation2 + $0x90] sm:$0xff]
      %v324 = vld [vmem:[#allocation2 + $0x98] sm:$0xff]
      %v325 = vld [vmem:[#allocation2 + $0xa0] sm:$0xff]
      %v326 = vld [vmem:[#allocation2 + $0xa8] sm:$0xff]
      %v327 = vld [vmem:[#allocation2 + $0xb0] sm:$0xff]
      %v328 = vld [vmem:[#allocation2 + $0xb8] sm:$0xff]
      %v329 = vld [vmem:[#allocation2 + $0xc0] sm:$0xff]
      %v330 = vld [vmem:[#allocation2 + $0xc8] sm:$0xff]
      %v331 = vld [vmem:[#allocation2 + $0xd0] sm:$0xff]
      %v332 = vld [vmem:[#allocation2 + $0xd8] sm:$0xff]
      %v333 = vld [vmem:[#allocation2 + $0xe0] sm:$0xff]
      %v334 = vld [vmem:[#allocation2 + $0xe8] sm:$0xff]
      %v335 = vld [vmem:[#allocation2 + $0xf0] sm:$0xff]
      %v336 = vld [vmem:[#allocation2 + $0xf8] sm:$0xff]
      %v337 = vld [vmem:[%s243] sm:$0xff]
      %v338 = vld [vmem:[%s243 + $0x8] sm:$0xff]
      %v339 = vld [vmem:[%s243 + $0x10] sm:$0xff]
      %v340 = vld [vmem:[%s243 + $0x18] sm:$0xff]
      %v341 = vld [vmem:[%s243 + $0x20] sm:$0xff]
      %v342 = vld [vmem:[%s243 + $0x28] sm:$0xff]
      %v343 = vld [vmem:[%s243 + $0x30] sm:$0xff]
      %v344 = vld [vmem:[%s243 + $0x38] sm:$0xff]
      %v345 = vld [vmem:[%s243 + $0x40] sm:$0xff]
      %v346 = vld [vmem:[%s243 + $0x48] sm:$0xff]
      %v347 = vld [vmem:[%s243 + $0x50] sm:$0xff]
      %v348 = vld [vmem:[%s243 + $0x58] sm:$0xff]
      %v349 = vld [vmem:[%s243 + $0x60] sm:$0xff]
      %v350 = vld [vmem:[%s243 + $0x68] sm:$0xff]
      %v351 = vld [vmem:[%s243 + $0x70] sm:$0xff]
      %v352 = vld [vmem:[%s243 + $0x78] sm:$0xff]
      %v353 = vld [vmem:[%s243 + $0x80] sm:$0xff]
      %v354 = vld [vmem:[%s243 + $0x88] sm:$0xff]
      %v355 = vld [vmem:[%s243 + $0x90] sm:$0xff]
      %v356 = vld [vmem:[%s243 + $0x98] sm:$0xff]
      %v357 = vld [vmem:[%s243 + $0xa0] sm:$0xff]
      %v358 = vld [vmem:[%s243 + $0xa8] sm:$0xff]
      %v359 = vld [vmem:[%s243 + $0xb0] sm:$0xff]
      %v360 = vld [vmem:[%s243 + $0xb8] sm:$0xff]
      %v361 = vld [vmem:[%s243 + $0xc0] sm:$0xff]
      %v362 = vld [vmem:[%s243 + $0xc8] sm:$0xff]
      %v363 = vld [vmem:[%s243 + $0xd0] sm:$0xff]
      %v364 = vld [vmem:[%s243 + $0xd8] sm:$0xff]
      %v365 = vld [vmem:[%s243 + $0xe0] sm:$0xff]
      %v366 = vld [vmem:[%s243 + $0xe8] sm:$0xff]
      %v367 = vld [vmem:[%s243 + $0xf0] sm:$0xff]
      %v368 = vld [vmem:[%s243 + $0xf8] sm:$0xff]
      %v369 = vld [vmem:[%s253] sm:$0xf]
      %v370 = vld [vmem:[%s253 + $0x4] sm:$0xf]
      %v371 = vld [vmem:[%s253 + $0x8] sm:$0xf]
      %v372 = vld [vmem:[%s253 + $0xc] sm:$0xf]
      %v373 = vld [vmem:[%s253 + $0x10] sm:$0xf]
      %v374 = vld [vmem:[%s253 + $0x14] sm:$0xf]
      %v375 = vld [vmem:[%s253 + $0x18] sm:$0xf]
      %v376 = vld [vmem:[%s253 + $0x1c] sm:$0xf]
      %v377 = vld [vmem:[%s253 + $0x20] sm:$0xf]
      %v378 = vld [vmem:[%s253 + $0x24] sm:$0xf]
      %v379 = vld [vmem:[%s253 + $0x28] sm:$0xf]
      %v380 = vld [vmem:[%s253 + $0x2c] sm:$0xf]
      %v381 = vld [vmem:[%s253 + $0x30] sm:$0xf]
      %v382 = vld [vmem:[%s253 + $0x34] sm:$0xf]
      %v383 = vld [vmem:[%s253 + $0x38] sm:$0xf]
      %v384 = vld [vmem:[%s253 + $0x3c] sm:$0xf]
      %v385 = vld [vmem:[%s253 + $0x40] sm:$0xf]
      %v386 = vld [vmem:[%s253 + $0x44] sm:$0xf]
      %v387 = vld [vmem:[%s253 + $0x48] sm:$0x3]
      %v420 = vunpack.c.l.b16 %v337
      %v421 = vunpack.c.h.b16 %v337
      %v422 = vunpack.c.l.b16 %v338
      %v423 = vunpack.c.h.b16 %v338
      %v424 = vunpack.c.l.b16 %v339
      %v425 = vunpack.c.h.b16 %v339
      %v426 = vunpack.c.l.b16 %v340
      %v427 = vunpack.c.h.b16 %v340
      %v428 = vunpack.c.l.b16 %v341
      %v429 = vunpack.c.h.b16 %v341
      %v430 = vunpack.c.l.b16 %v342
      %v431 = vunpack.c.h.b16 %v342
      %v432 = vunpack.c.l.b16 %v343
      %v433 = vunpack.c.h.b16 %v343
      %v434 = vunpack.c.l.b16 %v344
      %v435 = vunpack.c.h.b16 %v344
      %v436 = vunpack.c.l.b16 %v345
      %v437 = vunpack.c.h.b16 %v345
      %v438 = vunpack.c.l.b16 %v346
      %v439 = vunpack.c.h.b16 %v346
      %v440 = vunpack.c.l.b16 %v347
      %v441 = vunpack.c.h.b16 %v347
      %v442 = vunpack.c.l.b16 %v348
      %v443 = vunpack.c.h.b16 %v348
      %v444 = vunpack.c.l.b16 %v349
      %v445 = vunpack.c.h.b16 %v349
      %v446 = vunpack.c.l.b16 %v350
      %v447 = vunpack.c.h.b16 %v350
      %v448 = vunpack.c.l.b16 %v351
      %v449 = vunpack.c.h.b16 %v351
      %v450 = vunpack.c.l.b16 %v352
      %v451 = vunpack.c.h.b16 %v352
      %v452 = vunpack.c.l.b16 %v353
      %v453 = vunpack.c.h.b16 %v353
      %v454 = vunpack.c.l.b16 %v354
      %v455 = vunpack.c.h.b16 %v354
      %v456 = vunpack.c.l.b16 %v355
      %v457 = vunpack.c.h.b16 %v355
      %v458 = vunpack.c.l.b16 %v356
      %v459 = vunpack.c.h.b16 %v356
      %v460 = vunpack.c.l.b16 %v357
      %v461 = vunpack.c.h.b16 %v357
      %v462 = vunpack.c.l.b16 %v358
      %v463 = vunpack.c.h.b16 %v358
      %v464 = vunpack.c.l.b16 %v359
      %v465 = vunpack.c.h.b16 %v359
      %v466 = vunpack.c.l.b16 %v360
      %v467 = vunpack.c.h.b16 %v360
      %v468 = vunpack.c.l.b16 %v361
      %v469 = vunpack.c.h.b16 %v361
      %v470 = vunpack.c.l.b16 %v362
      %v471 = vunpack.c.h.b16 %v362
      %v472 = vunpack.c.l.b16 %v363
      %v473 = vunpack.c.h.b16 %v363
      %v474 = vunpack.c.l.b16 %v364
      %v475 = vunpack.c.h.b16 %v364
      %v476 = vunpack.c.l.b16 %v365
      %v477 = vunpack.c.h.b16 %v365
      %v478 = vunpack.c.l.b16 %v366
      %v479 = vunpack.c.h.b16 %v366
      %v480 = vunpack.c.l.b16 %v367
      %v481 = vunpack.c.h.b16 %v367
      %v482 = vunpack.c.l.b16 %v368
      %v483 = vunpack.c.h.b16 %v368
      %v484 = vpack.c.b16 %v422, %v420
      %v485 = vpack.c.b16 %v423, %v421
      %v486 = vpack.c.b16 %v426, %v424
      %v487 = vpack.c.b16 %v427, %v425
      %v488 = vpack.c.b16 %v430, %v428
      %v489 = vpack.c.b16 %v431, %v429
      %v490 = vpack.c.b16 %v434, %v432
      %v491 = vpack.c.b16 %v435, %v433
      %v492 = vpack.c.b16 %v438, %v436
      %v493 = vpack.c.b16 %v439, %v437
      %v494 = vpack.c.b16 %v442, %v440
      %v495 = vpack.c.b16 %v443, %v441
      %v496 = vpack.c.b16 %v446, %v444
      %v497 = vpack.c.b16 %v447, %v445
      %v498 = vpack.c.b16 %v450, %v448
      %v499 = vpack.c.b16 %v451, %v449
      %v500 = vpack.c.b16 %v454, %v452
      %v501 = vpack.c.b16 %v455, %v453
      %v502 = vpack.c.b16 %v458, %v456
      %v503 = vpack.c.b16 %v459, %v457
      %v504 = vpack.c.b16 %v462, %v460
      %v505 = vpack.c.b16 %v463, %v461
      %v506 = vpack.c.b16 %v466, %v464
      %v507 = vpack.c.b16 %v467, %v465
      %v508 = vpack.c.b16 %v470, %v468
      %v509 = vpack.c.b16 %v471, %v469
      %v510 = vpack.c.b16 %v474, %v472
      %v511 = vpack.c.b16 %v475, %v473
      %v512 = vpack.c.b16 %v478, %v476
      %v513 = vpack.c.b16 %v479, %v477
      %v514 = vpack.c.b16 %v482, %v480
      %v515 = vpack.c.b16 %v483, %v481
      %v551 = vunpack.c.l.b16 %v369
      %v552 = vunpack.c.l.b16 %v370
      %v553 = vunpack.c.l.b16 %v371
      %v554 = vunpack.c.l.b16 %v372
      %v555 = vunpack.c.l.b16 %v373
      %v556 = vunpack.c.l.b16 %v374
      %v557 = vunpack.c.l.b16 %v375
      %v558 = vunpack.c.l.b16 %v376
      %v559 = vunpack.c.l.b16 %v377
      %v560 = vunpack.c.l.b16 %v378
      %v561 = vunpack.c.l.b16 %v379
      %v562 = vunpack.c.l.b16 %v380
      %v563 = vunpack.c.l.b16 %v381
      %v564 = vunpack.c.l.b16 %v382
      %v565 = vunpack.c.l.b16 %v383
      %v566 = vunpack.c.l.b16 %v384
      %v567 = vunpack.c.l.b16 %v385
      %v568 = vunpack.c.l.b16 %v386
      %v569 = vunpack.c.l.b16 %v387
      %v570 = vpack.c.b16 %v552, %v551
      %v571 = vpack.c.b16 %v554, %v553
      %v572 = vpack.c.b16 %v556, %v555
      %v573 = vpack.c.b16 %v558, %v557
      %v574 = vpack.c.b16 %v560, %v559
      %v575 = vpack.c.b16 %v562, %v561
      %v576 = vpack.c.b16 %v564, %v563
      %v577 = vpack.c.b16 %v566, %v565
      %v578 = vpack.c.b16 %v568, %v567
      %v579 = vpack.c.b16 %v569, %v569
      %vm589 = vcmask 154624
      %v591 = vsel %vm589, %v485, 0
      %v594 = vsel %vm589, %v487, 0
      %v597 = vsel %vm589, %v489, 0
      %v600 = vsel %vm589, %v491, 0
      %v603 = vsel %vm589, %v493, 0
      %v606 = vsel %vm589, %v495, 0
      %v609 = vsel %vm589, %v497, 0
      %v612 = vsel %vm589, %v499, 0
      %v615 = vsel %vm589, %v501, 0
      %v618 = vsel %vm589, %v503, 0
      %v621 = vsel %vm589, %v505, 0
      %v624 = vsel %vm589, %v507, 0
      %v627 = vsel %vm589, %v509, 0
      %v630 = vsel %vm589, %v511, 0
      %v633 = vsel %vm589, %v513, 0
      %v636 = vsel %vm589, %v515, 0
      %vm638 = vcmask 1040384
      %vm639 = vcmask 1041408
      %v640 = vsel %vm638, 4294967295, 65535
      %v641 = vsel %vm639, %v640, 0
      %v643 = vand.u32 %v579, %v641
      %645 = vmatprep.subr.bf16.mxu0 0
      %646 = vmatpush1.bf16.msra.mxu0 %v570
      %647 = vmatprep.subr.bf16.mxu0 0
      %648 = vmatpush1.bf16.msra.mxu0 %v571
      %649 = vmatprep.subr.bf16.mxu0 0
      %650 = vmatpush1.bf16.msra.mxu0 %v572
      %651 = vmatprep.subr.bf16.mxu0 0
      %652 = vmatpush1.bf16.msra.mxu0 %v573
      %653 = vmatprep.subr.bf16.mxu0 0
      %654 = vmatpush1.bf16.msra.mxu0 %v574
      %655 = vmatprep.subr.bf16.mxu0 0
      %656 = vmatpush1.bf16.msra.mxu0 %v575
      %657 = vmatprep.subr.bf16.mxu0 0
      %658 = vmatpush1.bf16.msra.mxu0 %v576
      %659 = vmatprep.subr.bf16.mxu0 0
      %660 = vmatpush1.bf16.msra.mxu0 %v577
      %661 = vmatprep.subr.bf16.mxu0 0
      %662 = vmatpush1.bf16.msra.mxu0 %v578
      %663 = vmatprep.subr.bf16.mxu0 0
      %664 = vmatpush1.bf16.msra.mxu0 %v643
      %665 = vmatprep.subr.bf16.mxu0 0
      %666 = vmatpush1.bf16.msra.mxu0 0
      %667 = vmatprep.subr.bf16.mxu0 0
      %668 = vmatpush1.bf16.msra.mxu0 0
      %669 = vmatprep.subr.bf16.mxu0 0
      %670 = vmatpush1.bf16.msra.mxu0 0
      %671 = vmatprep.subr.bf16.mxu0 0
      %672 = vmatpush1.bf16.msra.mxu0 0
      %673 = vmatprep.subr.bf16.mxu0 0
      %674 = vmatpush1.bf16.msra.mxu0 0
      %675 = vmatprep.subr.bf16.mxu0 0
      %676 = vmatpush1.bf16.msra.mxu0 0
      %677 = vmatprep.mubr.bf16.mxu0 %v591
      %678 = vmatmul.mubr.bf16.gmra.mrb[0].mxu0 %v484
      %v679 = vpop.f32.mrb[0].mxu0
      %v680 = vadd.f32 0.0, %v679
      %v681 = vpop.f32.mrb[0].mxu0
      %v682 = vpop.f32.mrb[0].mxu0
      %v683 = vadd.f32 0.0, %v682
      %v684 = vpop.f32.mrb[0].mxu0
      %685 = vmatprep.mubr.bf16.mxu0 %v594
      %686 = vmatmul.mubr.bf16.gmra.mrb[0].mxu0 %v486
      %v687 = vpop.f32.mrb[0].mxu0
      %v688 = vadd.f32 0.0, %v687
      %v689 = vpop.f32.mrb[0].mxu0
      %v690 = vpop.f32.mrb[0].mxu0
      %v691 = vadd.f32 0.0, %v690
      %v692 = vpop.f32.mrb[0].mxu0
      %693 = vmatprep.mubr.bf16.mxu0 %v597
      %694 = vmatmul.mubr.bf16.gmra.mrb[0].mxu0 %v488
      %v695 = vpop.f32.mrb[0].mxu0
      %v696 = vadd.f32 0.0, %v695
      %v697 = vpop.f32.mrb[0].mxu0
      %v698 = vpop.f32.mrb[0].mxu0
      %v699 = vadd.f32 0.0, %v698
      %v700 = vpop.f32.mrb[0].mxu0
      %701 = vmatprep.mubr.bf16.mxu0 %v600
      %702 = vmatmul.mubr.bf16.gmra.mrb[0].mxu0 %v490
      %v703 = vpop.f32.mrb[0].mxu0
      %v704 = vadd.f32 0.0, %v703
      %v705 = vpop.f32.mrb[0].mxu0
      %v706 = vpop.f32.mrb[0].mxu0
      %v707 = vadd.f32 0.0, %v706
      %v708 = vpop.f32.mrb[0].mxu0
      %709 = vmatprep.mubr.bf16.mxu0 %v603
      %710 = vmatmul.mubr.bf16.gmra.mrb[0].mxu0 %v492
      %v711 = vpop.f32.mrb[0].mxu0
      %v712 = vadd.f32 0.0, %v711
      %v713 = vpop.f32.mrb[0].mxu0
      %v714 = vpop.f32.mrb[0].mxu0
      %v715 = vadd.f32 0.0, %v714
      %v716 = vpop.f32.mrb[0].mxu0
      %717 = vmatprep.mubr.bf16.mxu0 %v606
      %718 = vmatmul.mubr.bf16.gmra.mrb[0].mxu0 %v494
      %v719 = vpop.f32.mrb[0].mxu0
      %v720 = vadd.f32 0.0, %v719
      %v721 = vpop.f32.mrb[0].mxu0
      %v722 = vpop.f32.mrb[0].mxu0
      %v723 = vadd.f32 0.0, %v722
      %v724 = vpop.f32.mrb[0].mxu0
      %725 = vmatprep.mubr.bf16.mxu0 %v609
      %726 = vmatmul.mubr.bf16.gmra.mrb[0].mxu0 %v496
      %v727 = vpop.f32.mrb[0].mxu0
      %v728 = vadd.f32 0.0, %v727
      %v729 = vpop.f32.mrb[0].mxu0
      %v730 = vpop.f32.mrb[0].mxu0
      %v731 = vadd.f32 0.0, %v730
      %v732 = vpop.f32.mrb[0].mxu0
      %733 = vmatprep.mubr.bf16.mxu0 %v612
      %734 = vmatmul.mubr.bf16.gmra.mrb[0].mxu0 %v498
      %v735 = vpop.f32.mrb[0].mxu0
      %v736 = vadd.f32 0.0, %v735
      %v737 = vpop.f32.mrb[0].mxu0
      %v738 = vpop.f32.mrb[0].mxu0
      %v739 = vadd.f32 0.0, %v738
      %v740 = vpop.f32.mrb[0].mxu0
      %741 = vmatprep.mubr.bf16.mxu0 %v615
      %742 = vmatmul.mubr.bf16.gmra.mrb[0].mxu0 %v500
      %v743 = vpop.f32.mrb[0].mxu0
      %v744 = vadd.f32 0.0, %v743
      %v745 = vpop.f32.mrb[0].mxu0
      %v746 = vpop.f32.mrb[0].mxu0
      %v747 = vadd.f32 0.0, %v746
      %v748 = vpop.f32.mrb[0].mxu0
      %749 = vmatprep.mubr.bf16.mxu0 %v618
      %750 = vmatmul.mubr.bf16.gmra.mrb[0].mxu0 %v502
      %v751 = vpop.f32.mrb[0].mxu0
      %v752 = vadd.f32 0.0, %v751
      %v753 = vpop.f32.mrb[0].mxu0
      %v754 = vpop.f32.mrb[0].mxu0
      %v755 = vadd.f32 0.0, %v754
      %v756 = vpop.f32.mrb[0].mxu0
      %757 = vmatprep.mubr.bf16.mxu0 %v621
      %758 = vmatmul.mubr.bf16.gmra.mrb[0].mxu0 %v504
      %v759 = vpop.f32.mrb[0].mxu0
      %v760 = vadd.f32 0.0, %v759
      %v761 = vpop.f32.mrb[0].mxu0
      %v762 = vpop.f32.mrb[0].mxu0
      %v763 = vadd.f32 0.0, %v762
      %v764 = vpop.f32.mrb[0].mxu0
      %765 = vmatprep.mubr.bf16.mxu0 %v624
      %766 = vmatmul.mubr.bf16.gmra.mrb[0].mxu0 %v506
      %v767 = vpop.f32.mrb[0].mxu0
      %v768 = vadd.f32 0.0, %v767
      %v769 = vpop.f32.mrb[0].mxu0
      %v770 = vpop.f32.mrb[0].mxu0
      %v771 = vadd.f32 0.0, %v770
      %v772 = vpop.f32.mrb[0].mxu0
      %773 = vmatprep.mubr.bf16.mxu0 %v627
      %774 = vmatmul.mubr.bf16.gmra.mrb[0].mxu0 %v508
      %v775 = vpop.f32.mrb[0].mxu0
      %v776 = vadd.f32 0.0, %v775
      %v777 = vpop.f32.mrb[0].mxu0
      %v778 = vpop.f32.mrb[0].mxu0
      %v779 = vadd.f32 0.0, %v778
      %v780 = vpop.f32.mrb[0].mxu0
      %781 = vmatprep.mubr.bf16.mxu0 %v630
      %782 = vmatmul.mubr.bf16.gmra.mrb[0].mxu0 %v510
      %v783 = vpop.f32.mrb[0].mxu0
      %v784 = vadd.f32 0.0, %v783
      %v785 = vpop.f32.mrb[0].mxu0
      %v786 = vpop.f32.mrb[0].mxu0
      %v787 = vadd.f32 0.0, %v786
      %v788 = vpop.f32.mrb[0].mxu0
      %789 = vmatprep.mubr.bf16.mxu0 %v633
      %790 = vmatmul.mubr.bf16.gmra.mrb[0].mxu0 %v512
      %v791 = vpop.f32.mrb[0].mxu0
      %v792 = vadd.f32 0.0, %v791
      %v793 = vpop.f32.mrb[0].mxu0
      %v794 = vpop.f32.mrb[0].mxu0
      %v795 = vadd.f32 0.0, %v794
      %v796 = vpop.f32.mrb[0].mxu0
      %797 = vmatprep.mubr.bf16.mxu0 %v636
      %798 = vmatmul.mubr.bf16.gmra.mrb[0].mxu0 %v514
      %v799 = vpop.f32.mrb[0].mxu0
      %v800 = vadd.f32 0.0, %v799
      %v801 = vpop.f32.mrb[0].mxu0
      %v802 = vpop.f32.mrb[0].mxu0
      %v803 = vadd.f32 0.0, %v802
      %v804 = vpop.f32.mrb[0].mxu0
      %805 = vdwg.mxu0
      %v806 = vadd.f32 %v305, %v680
      %v807 = vadd.f32 %v306, %v683
      %v808 = vadd.f32 %v307, %v688
      %v809 = vadd.f32 %v308, %v691
      %v810 = vadd.f32 %v309, %v696
      %v811 = vadd.f32 %v310, %v699
      %v812 = vadd.f32 %v311, %v704
      %v813 = vadd.f32 %v312, %v707
      %v814 = vadd.f32 %v313, %v712
      %v815 = vadd.f32 %v314, %v715
      %v816 = vadd.f32 %v315, %v720
      %v817 = vadd.f32 %v316, %v723
      %v818 = vadd.f32 %v317, %v728
      %v819 = vadd.f32 %v318, %v731
      %v820 = vadd.f32 %v319, %v736
      %v821 = vadd.f32 %v320, %v739
      %v822 = vadd.f32 %v321, %v744
      %v823 = vadd.f32 %v322, %v747
      %v824 = vadd.f32 %v323, %v752
      %v825 = vadd.f32 %v324, %v755
      %v826 = vadd.f32 %v325, %v760
      %v827 = vadd.f32 %v326, %v763
      %v828 = vadd.f32 %v327, %v768
      %v829 = vadd.f32 %v328, %v771
      %v830 = vadd.f32 %v329, %v776
      %v831 = vadd.f32 %v330, %v779
      %v832 = vadd.f32 %v331, %v784
      %v833 = vadd.f32 %v332, %v787
      %v834 = vadd.f32 %v333, %v792
      %v835 = vadd.f32 %v334, %v795
      %v836 = vadd.f32 %v335, %v800
      %v837 = vadd.f32 %v336, %v803
      %vm838 = vcmask 523264
      %839 = vst.msk [vmem:[#allocation2] sm:$0xff] %vm838, %v806
      %840 = vst.msk [vmem:[#allocation2 + $0x8] sm:$0xff] %vm838, %v807
      %841 = vst.msk [vmem:[#allocation2 + $0x10] sm:$0xff] %vm838, %v808
      %842 = vst.msk [vmem:[#allocation2 + $0x18] sm:$0xff] %vm838, %v809
      %843 = vst.msk [vmem:[#allocation2 + $0x20] sm:$0xff] %vm838, %v810
      %844 = vst.msk [vmem:[#allocation2 + $0x28] sm:$0xff] %vm838, %v811
      %845 = vst.msk [vmem:[#allocation2 + $0x30] sm:$0xff] %vm838, %v812
      %846 = vst.msk [vmem:[#allocation2 + $0x38] sm:$0xff] %vm838, %v813
      %847 = vst.msk [vmem:[#allocation2 + $0x40] sm:$0xff] %vm838, %v814
      %848 = vst.msk [vmem:[#allocation2 + $0x48] sm:$0xff] %vm838, %v815
      %849 = vst.msk [vmem:[#allocation2 + $0x50] sm:$0xff] %vm838, %v816
      %850 = vst.msk [vmem:[#allocation2 + $0x58] sm:$0xff] %vm838, %v817
      %851 = vst.msk [vmem:[#allocation2 + $0x60] sm:$0xff] %vm838, %v818
      %852 = vst.msk [vmem:[#allocation2 + $0x68] sm:$0xff] %vm838, %v819
      %853 = vst.msk [vmem:[#allocation2 + $0x70] sm:$0xff] %vm838, %v820
      %854 = vst.msk [vmem:[#allocation2 + $0x78] sm:$0xff] %vm838, %v821
      %855 = vst.msk [vmem:[#allocation2 + $0x80] sm:$0xff] %vm838, %v822
      %856 = vst.msk [vmem:[#allocation2 + $0x88] sm:$0xff] %vm838, %v823
      %857 = vst.msk [vmem:[#allocation2 + $0x90] sm:$0xff] %vm838, %v824
      %858 = vst.msk [vmem:[#allocation2 + $0x98] sm:$0xff] %vm838, %v825
      %859 = vst.msk [vmem:[#allocation2 + $0xa0] sm:$0xff] %vm838, %v826
      %860 = vst.msk [vmem:[#allocation2 + $0xa8] sm:$0xff] %vm838, %v827
      %861 = vst.msk [vmem:[#allocation2 + $0xb0] sm:$0xff] %vm838, %v828
      %862 = vst.msk [vmem:[#allocation2 + $0xb8] sm:$0xff] %vm838, %v829
      %863 = vst.msk [vmem:[#allocation2 + $0xc0] sm:$0xff] %vm838, %v830
      %864 = vst.msk [vmem:[#allocation2 + $0xc8] sm:$0xff] %vm838, %v831
      %865 = vst.msk [vmem:[#allocation2 + $0xd0] sm:$0xff] %vm838, %v832
      %866 = vst.msk [vmem:[#allocation2 + $0xd8] sm:$0xff] %vm838, %v833
      %867 = vst.msk [vmem:[#allocation2 + $0xe0] sm:$0xff] %vm838, %v834
      %868 = vst.msk [vmem:[#allocation2 + $0xe8] sm:$0xff] %vm838, %v835
      %869 = vst.msk [vmem:[#allocation2 + $0xf0] sm:$0xff] %vm838, %v836
      %870 = vst.msk [vmem:[#allocation2 + $0xf8] sm:$0xff] %vm838, %v837
      // Predicated region
      $region37: #{tpu_custom_call.1} parent=31 // pred_check
        %p871 = pneg %p268
      $region38: #{tpu_custom_call.1} parent=31 // pred_check_branch
        %873 = sbr.rel (%p871) target = $region40
      $region39: #{tpu_custom_call.1} parent=31 // pred_region
        %v874 = vld [vmem:[#allocation2] sm:$0xff]
        %v875 = vld [vmem:[#allocation2 + $0x8] sm:$0xff]
        %v876 = vld [vmem:[#allocation2 + $0x10] sm:$0xff]
        %v877 = vld [vmem:[#allocation2 + $0x18] sm:$0xff]
        %v878 = vld [vmem:[#allocation2 + $0x20] sm:$0xff]
        %v879 = vld [vmem:[#allocation2 + $0x28] sm:$0xff]
        %v880 = vld [vmem:[#allocation2 + $0x30] sm:$0xff]
        %v881 = vld [vmem:[#allocation2 + $0x38] sm:$0xff]
        %v882 = vld [vmem:[#allocation2 + $0x40] sm:$0xff]
        %v883 = vld [vmem:[#allocation2 + $0x48] sm:$0xff]
        %v884 = vld [vmem:[#allocation2 + $0x50] sm:$0xff]
        %v885 = vld [vmem:[#allocation2 + $0x58] sm:$0xff]
        %v886 = vld [vmem:[#allocation2 + $0x60] sm:$0xff]
        %v887 = vld [vmem:[#allocation2 + $0x68] sm:$0xff]
        %v888 = vld [vmem:[#allocation2 + $0x70] sm:$0xff]
        %v889 = vld [vmem:[#allocation2 + $0x78] sm:$0xff]
        %v890 = vld [vmem:[#allocation2 + $0x80] sm:$0xff]
        %v891 = vld [vmem:[#allocation2 + $0x88] sm:$0xff]
        %v892 = vld [vmem:[#allocation2 + $0x90] sm:$0xff]
        %v893 = vld [vmem:[#allocation2 + $0x98] sm:$0xff]
        %v894 = vld [vmem:[#allocation2 + $0xa0] sm:$0xff]
        %v895 = vld [vmem:[#allocation2 + $0xa8] sm:$0xff]
        %v896 = vld [vmem:[#allocation2 + $0xb0] sm:$0xff]
        %v897 = vld [vmem:[#allocation2 + $0xb8] sm:$0xff]
        %v898 = vld [vmem:[#allocation2 + $0xc0] sm:$0xff]
        %v899 = vld [vmem:[#allocation2 + $0xc8] sm:$0xff]
        %v900 = vld [vmem:[#allocation2 + $0xd0] sm:$0xff]
        %v901 = vld [vmem:[#allocation2 + $0xd8] sm:$0xff]
        %v902 = vld [vmem:[#allocation2 + $0xe0] sm:$0xff]
        %v903 = vld [vmem:[#allocation2 + $0xe8] sm:$0xff]
        %v904 = vld [vmem:[#allocation2 + $0xf0] sm:$0xff]
        %v905 = vld [vmem:[#allocation2 + $0xf8] sm:$0xff]
        %v906 = vld [vmem:[%s257] sm:$0x1]
        %v908 = vlaneseq
        %v909 = vshrl.u32 %v908, 7
        %v910 = vsub.s32 0, %v909
        %v911 = vrot.slane %v906, %v910
        %v913 = vadd.f32 %v874, %v911
        %v914 = vadd.f32 %v875, %v911
        %v915 = vadd.f32 %v876, %v911
        %v916 = vadd.f32 %v877, %v911
        %v917 = vadd.f32 %v878, %v911
        %v918 = vadd.f32 %v879, %v911
        %v919 = vadd.f32 %v880, %v911
        %v920 = vadd.f32 %v881, %v911
        %v921 = vadd.f32 %v882, %v911
        %v922 = vadd.f32 %v883, %v911
        %v923 = vadd.f32 %v884, %v911
        %v924 = vadd.f32 %v885, %v911
        %v925 = vadd.f32 %v886, %v911
        %v926 = vadd.f32 %v887, %v911
        %v927 = vadd.f32 %v888, %v911
        %v928 = vadd.f32 %v889, %v911
        %v929 = vadd.f32 %v890, %v911
        %v930 = vadd.f32 %v891, %v911
        %v931 = vadd.f32 %v892, %v911
        %v932 = vadd.f32 %v893, %v911
        %v933 = vadd.f32 %v894, %v911
        %v934 = vadd.f32 %v895, %v911
        %v935 = vadd.f32 %v896, %v911
        %v936 = vadd.f32 %v897, %v911
        %v937 = vadd.f32 %v898, %v911
        %v938 = vadd.f32 %v899, %v911
        %v939 = vadd.f32 %v900, %v911
        %v940 = vadd.f32 %v901, %v911
        %v941 = vadd.f32 %v902, %v911
        %v942 = vadd.f32 %v903, %v911
        %v943 = vadd.f32 %v904, %v911
        %v944 = vadd.f32 %v905, %v911
        %v945 = vpack.c.bf16 %v914, %v913
        %v946 = vpack.c.bf16 %v916, %v915
        %v947 = vpack.c.bf16 %v918, %v917
        %v948 = vpack.c.bf16 %v920, %v919
        %v949 = vpack.c.bf16 %v922, %v921
        %v950 = vpack.c.bf16 %v924, %v923
        %v951 = vpack.c.bf16 %v926, %v925
        %v952 = vpack.c.bf16 %v928, %v927
        %v953 = vpack.c.bf16 %v930, %v929
        %v954 = vpack.c.bf16 %v932, %v931
        %v955 = vpack.c.bf16 %v934, %v933
        %v956 = vpack.c.bf16 %v936, %v935
        %v957 = vpack.c.bf16 %v938, %v937
        %v958 = vpack.c.bf16 %v940, %v939
        %v959 = vpack.c.bf16 %v942, %v941
        %v960 = vpack.c.bf16 %v944, %v943
        %v977 = vunpack.c.l.b16 %v945
        %v978 = vunpack.c.h.b16 %v945
        %v979 = vunpack.c.l.b16 %v946
        %v980 = vunpack.c.h.b16 %v946
        %v981 = vunpack.c.l.b16 %v947
        %v982 = vunpack.c.h.b16 %v947
        %v983 = vunpack.c.l.b16 %v948
        %v984 = vunpack.c.h.b16 %v948
        %v985 = vunpack.c.l.b16 %v949
        %v986 = vunpack.c.h.b16 %v949
        %v987 = vunpack.c.l.b16 %v950
        %v988 = vunpack.c.h.b16 %v950
        %v989 = vunpack.c.l.b16 %v951
        %v990 = vunpack.c.h.b16 %v951
        %v991 = vunpack.c.l.b16 %v952
        %v992 = vunpack.c.h.b16 %v952
        %v993 = vunpack.c.l.b16 %v953
        %v994 = vunpack.c.h.b16 %v953
        %v995 = vunpack.c.l.b16 %v954
        %v996 = vunpack.c.h.b16 %v954
        %v997 = vunpack.c.l.b16 %v955
        %v998 = vunpack.c.h.b16 %v955
        %v999 = vunpack.c.l.b16 %v956
        %v1000 = vunpack.c.h.b16 %v956
        %v1001 = vunpack.c.l.b16 %v957
        %v1002 = vunpack.c.h.b16 %v957
        %v1003 = vunpack.c.l.b16 %v958
        %v1004 = vunpack.c.h.b16 %v958
        %v1005 = vunpack.c.l.b16 %v959
        %v1006 = vunpack.c.h.b16 %v959
        %v1007 = vunpack.c.l.b16 %v960
        %v1008 = vunpack.c.h.b16 %v960
        %v1009 = vpack.c.b16 %v977, %v977
        %v1010 = vpack.c.b16 %v978, %v978
        %v1011 = vpack.c.b16 %v979, %v979
        %v1012 = vpack.c.b16 %v980, %v980
        %v1013 = vpack.c.b16 %v981, %v981
        %v1014 = vpack.c.b16 %v982, %v982
        %v1015 = vpack.c.b16 %v983, %v983
        %v1016 = vpack.c.b16 %v984, %v984
        %v1017 = vpack.c.b16 %v985, %v985
        %v1018 = vpack.c.b16 %v986, %v986
        %v1019 = vpack.c.b16 %v987, %v987
        %v1020 = vpack.c.b16 %v988, %v988
        %v1021 = vpack.c.b16 %v989, %v989
        %v1022 = vpack.c.b16 %v990, %v990
        %v1023 = vpack.c.b16 %v991, %v991
        %v1024 = vpack.c.b16 %v992, %v992
        %v1025 = vpack.c.b16 %v993, %v993
        %v1026 = vpack.c.b16 %v994, %v994
        %v1027 = vpack.c.b16 %v995, %v995
        %v1028 = vpack.c.b16 %v996, %v996
        %v1029 = vpack.c.b16 %v997, %v997
        %v1030 = vpack.c.b16 %v998, %v998
        %v1031 = vpack.c.b16 %v999, %v999
        %v1032 = vpack.c.b16 %v1000, %v1000
        %v1033 = vpack.c.b16 %v1001, %v1001
        %v1034 = vpack.c.b16 %v1002, %v1002
        %v1035 = vpack.c.b16 %v1003, %v1003
        %v1036 = vpack.c.b16 %v1004, %v1004
        %v1037 = vpack.c.b16 %v1005, %v1005
        %v1038 = vpack.c.b16 %v1006, %v1006
        %v1039 = vpack.c.b16 %v1007, %v1007
        %v1040 = vpack.c.b16 %v1008, %v1008
        %vm1073 = vcmask 519168
        %1074 = vst.msk [vmem:[%s265] sm:$0xf] %vm1073, %v1009
        %1075 = vst.msk [vmem:[%s265 + $0x4] sm:$0xf] %vm1073, %v1010
        %1076 = vst.msk [vmem:[%s265 + $0x8] sm:$0xf] %vm1073, %v1011
        %1077 = vst.msk [vmem:[%s265 + $0xc] sm:$0xf] %vm1073, %v1012
        %1078 = vst.msk [vmem:[%s265 + $0x10] sm:$0xf] %vm1073, %v1013
        %1079 = vst.msk [vmem:[%s265 + $0x14] sm:$0xf] %vm1073, %v1014
        %1080 = vst.msk [vmem:[%s265 + $0x18] sm:$0xf] %vm1073, %v1015
        %1081 = vst.msk [vmem:[%s265 + $0x1c] sm:$0xf] %vm1073, %v1016
        %1082 = vst.msk [vmem:[%s265 + $0x20] sm:$0xf] %vm1073, %v1017
        %1083 = vst.msk [vmem:[%s265 + $0x24] sm:$0xf] %vm1073, %v1018
        %1084 = vst.msk [vmem:[%s265 + $0x28] sm:$0xf] %vm1073, %v1019
        %1085 = vst.msk [vmem:[%s265 + $0x2c] sm:$0xf] %vm1073, %v1020
        %1086 = vst.msk [vmem:[%s265 + $0x30] sm:$0xf] %vm1073, %v1021
        %1087 = vst.msk [vmem:[%s265 + $0x34] sm:$0xf] %vm1073, %v1022
        %1088 = vst.msk [vmem:[%s265 + $0x38] sm:$0xf] %vm1073, %v1023
        %1089 = vst.msk [vmem:[%s265 + $0x3c] sm:$0xf] %vm1073, %v1024
        %1090 = vst.msk [vmem:[%s265 + $0x40] sm:$0xf] %vm1073, %v1025
        %1091 = vst.msk [vmem:[%s265 + $0x44] sm:$0xf] %vm1073, %v1026
        %1092 = vst.msk [vmem:[%s265 + $0x48] sm:$0xf] %vm1073, %v1027
        %1093 = vst.msk [vmem:[%s265 + $0x4c] sm:$0xf] %vm1073, %v1028
        %1094 = vst.msk [vmem:[%s265 + $0x50] sm:$0xf] %vm1073, %v1029
        %1095 = vst.msk [vmem:[%s265 + $0x54] sm:$0xf] %vm1073, %v1030
        %1096 = vst.msk [vmem:[%s265 + $0x58] sm:$0xf] %vm1073, %v1031
        %1097 = vst.msk [vmem:[%s265 + $0x5c] sm:$0xf] %vm1073, %v1032
        %1098 = vst.msk [vmem:[%s265 + $0x60] sm:$0xf] %vm1073, %v1033
        %1099 = vst.msk [vmem:[%s265 + $0x64] sm:$0xf] %vm1073, %v1034
        %1100 = vst.msk [vmem:[%s265 + $0x68] sm:$0xf] %vm1073, %v1035
        %1101 = vst.msk [vmem:[%s265 + $0x6c] sm:$0xf] %vm1073, %v1036
        %1102 = vst.msk [vmem:[%s265 + $0x70] sm:$0xf] %vm1073, %v1037
        %1103 = vst.msk [vmem:[%s265 + $0x74] sm:$0xf] %vm1073, %v1038
        %1104 = vst.msk [vmem:[%s265 + $0x78] sm:$0xf] %vm1073, %v1039
        %1105 = vst.msk [vmem:[%s265 + $0x7c] sm:$0xf] %vm1073, %v1040
      $region40: #{tpu_custom_call.1} parent=31 // pred_fallthru
        _
      %s1106 = smul.u32 32, %s19
      %p1107 = scmp.lt.s32.totalorder %s1106, 255
      %s1108 = scalar_select %p1107, %s1106, 255
      %p1109 = scmp.lt.s32.totalorder %s20, 0
      %s1110 = scalar_select %p1109, %s20, 0
      %s1111 = sadd.s32 %s1110, %s1108
      %s1112 = smul.addr %s1111, 4
      %s1113 = scalar_lea.vmem %s3, %s1112
      // Predicated region
      $region41: #{tpu_custom_call.1} parent=31 // pred_check
        %p1114 = pneg %p135
      $region42: #{tpu_custom_call.1} parent=31 // pred_check_branch
        %1116 = sbr.rel (%p1114) target = $region44
      $region43: #{tpu_custom_call.1} parent=31 // pred_region
        %s1117 = smul.u32 32, %s19
      $region44: #{tpu_custom_call.1} parent=31 // pred_fallthru
        _
    $region32: #{tpu_custom_call.1} parent=5 // pred_fallthru
      _
    %p1118 = scmp.le.s32.totalorder 2, %s9
    // Predicated region
    $region45: #{tpu_custom_call.1} parent=5 // pred_check
      %p1119 = pneg %p1118
    $region46: #{tpu_custom_call.1} parent=5 // pred_check_branch
      %1121 = sbr.rel (%p1119) target = $region48
    $region47: #{tpu_custom_call.1} parent=5 // pred_region
      %s1122 = ssub.s32 %s9, 2
      // Predicated region
      $region49: #{tpu_custom_call.1} parent=47 // pred_check
        %p1123 = pneg %p141
      $region50: #{tpu_custom_call.1} parent=47 // pred_check_branch
        %1125 = sbr.rel (%p1123) target = $region52
      $region51: #{tpu_custom_call.1} parent=47 // pred_region
        %s1126 = smul.u32 32, %s22
        %p1127 = scmp.lt.s32.totalorder %s1126, 255
        %s1128 = scalar_select %p1127, %s1126, 255
        %p1129 = scmp.lt.s32.totalorder %s23, 0
        %s1130 = scalar_select %p1129, %s23, 0
        %s1131 = sadd.s32 %s1130, %s1128
        %s1132 = smul.addr %s1131, 4
        %s1133 = scalar_lea.vmem %s3, %s1132
      $region52: #{tpu_custom_call.1} parent=47 // pred_fallthru
        _
    $region48: #{tpu_custom_call.1} parent=5 // pred_fallthru
      _
  $region6: #{tpu_custom_call.1} parent=0 // loop_footer
    %s13 = sadd.s32 1, %s9
  $region7: #{tpu_custom_call.1} parent=0 // loop_footer_branch
    %8 = sbr.rel target = $region3
  $region8: #{tpu_custom_call.1} parent=0 // loop_exit
    _

</llo_original>
